<compile_context>
chip_gen: v7x
topology: tpu7x:2x2x1
jax: 0.10.0
libtpu: 0.0.40
codegen_flags: <defaults>
</compile_context>

<pallas_src>
import jax
import jax.numpy as jnp
import numpy as np
from jax.experimental import pallas as pl
from jax.experimental.pallas import tpu as pltpu


def _round_up(v, m):
    return ((v + m - 1) // m) * m


def _verhor_kernel(x_ref, w_ref, b_ref, o_ref):
    # x_ref: (TB, K)  flattened inputs, K = hor_in * ver_in
    # w_ref: (K, N)   fused weight,      N = hor_out * ver_out
    # b_ref: (1, N)   flattened bias
    # o_ref: (TB, N)
    acc = jnp.dot(x_ref[...], w_ref[...], preferred_element_type=jnp.float32)
    o_ref[...] = (acc + b_ref[...]).astype(o_ref.dtype)


def verhor_mat(x, w_ver, w_hor, b, *, block_b=256):
    """y[i] = W_hor @ (x[i] @ W_ver^T) + b   for x of shape (B, hor_in, ver_in)."""
    B, hor_in, ver_in = x.shape
    ver_out = w_ver.shape[0]
    hor_out = w_hor.shape[0]
    K = hor_in * ver_in
    N = hor_out * ver_out

    # One-time weight fusion (wrapper-side layout plumbing, outside the kernel).
    # Right trade-off for the small ver/hor dims this module is used with; for
    # large dims a two-stage tiled matmul would be preferable.
    w_fused = jnp.einsum("ph,ov->hvpo", w_hor, w_ver).reshape(K, N)
    b_flat = b.reshape(1, N)

    # Flatten each (hor_in, ver_in) sample to one row; pad batch to the tile.
    x_flat = x.reshape(B, K)
    tb = min(block_b, _round_up(B, 8))
    b_pad = _round_up(B, tb)
    if b_pad != B:
        x_flat = jnp.pad(x_flat, ((0, b_pad - B), (0, 0)))

    grid = (b_pad // tb,)
    out = pl.pallas_call(
        _verhor_kernel,
        out_shape=jax.ShapeDtypeStruct((b_pad, N), x.dtype),
        grid_spec=pltpu.PrefetchScalarGridSpec(
            num_scalar_prefetch=0,
            grid=grid,
            in_specs=[
                pl.BlockSpec((tb, K), lambda i: (i, 0)),   # batch tile of inputs
                pl.BlockSpec((K, N), lambda i: (0, 0)),    # fused weight (constant block)
                pl.BlockSpec((1, N), lambda i: (0, 0)),    # bias (constant block)
            ],
            out_specs=pl.BlockSpec((tb, N), lambda i: (i, 0)),
        ),
        compiler_params=pltpu.CompilerParams(
            dimension_semantics=("parallel",)),
        cost_estimate=pl.CostEstimate(
            flops=2 * b_pad * K * N,
            transcendentals=0,
            bytes_accessed=4 * (b_pad * K + K * N + N + b_pad * N)),
    )(x_flat, w_fused, b_flat)

    return out[:B].reshape(B, hor_out, ver_out)


def reference(x, w_ver, w_hor, b):
    hp = jax.lax.Precision.HIGHEST
    t = jnp.einsum("bhv,ov->bho", x, w_ver, precision=hp)   # self.ver(x)
    y = jnp.einsum("ph,bho->bpo", w_hor, t, precision=hp)   # self.hor on dim -2
    return y + b[None]


if __name__ == "__main__":
    batch, ver_in, ver_out, hor_in, hor_out = 2, 16, 32, 8, 24

    key = jax.random.PRNGKey(0)
    k_x, k_wv, k_wh, k_b, k_x2 = jax.random.split(key, 5)

    x = jax.random.normal(k_x, (batch, hor_in, ver_in), dtype=jnp.float32)
    w_ver = jax.random.normal(k_wv, (ver_out, ver_in), dtype=jnp.float32) * 0.1
    w_hor = jax.random.normal(k_wh, (hor_out, hor_in), dtype=jnp.float32) * 0.1
    # xavier_normal_(b, gain=calculate_gain('relu')=sqrt(2))
    gain = np.sqrt(2.0)
    std = gain * np.sqrt(2.0 / (hor_out + ver_out))
    b = jax.random.normal(k_b, (hor_out, ver_out), dtype=jnp.float32) * std

    out = jax.block_until_ready(verhor_mat(x, w_ver, w_hor, b))
    ref = jax.block_until_ready(reference(x, w_ver, w_hor, b))
    # Tolerance absorbs MXU f32 pass / accumulation-order differences between the
    # fused single-GEMM kernel and the two-stage XLA reference (real layout bugs
    # would produce O(0.1) errors).
    np.testing.assert_allclose(np.asarray(out), np.asarray(ref), rtol=5e-3, atol=5e-3)

    # Second shape: batch not a multiple of the tile -> exercises padding + grid > 1.
    x2 = jax.random.normal(k_x2, (37, hor_in, ver_in), dtype=jnp.float32)
    out2 = jax.block_until_ready(verhor_mat(x2, w_ver, w_hor, b, block_b=16))
    ref2 = jax.block_until_ready(reference(x2, w_ver, w_hor, b))
    np.testing.assert_allclose(np.asarray(out2), np.asarray(ref2), rtol=5e-3, atol=5e-3)

    print("KERNEL_OK")
</pallas_src>

<mosaic_0001>
module attributes {stable_mosaic.version = 11 : i64} {
  func.func @_verhor_kernel(%arg0: i32, %arg1: memref<8x128xf32, #tpu.memory_space<vmem>>, %arg2: memref<128x768xf32, #tpu.memory_space<vmem>>, %arg3: memref<1x768xf32, #tpu.memory_space<vmem>>, %arg4: memref<8x768xf32, #tpu.memory_space<vmem>>) attributes {dimension_semantics = [#tpu.dimension_semantics<parallel>], iteration_bounds = array<i64: 1>, scalar_prefetch = 0 : i64, scratch_operands = 0 : i64, tpu.core_type = #tpu.core_type<tc>, window_params = [{transform_indices = @transform_0, window_bounds = array<i64: 8, 128>}, {pipeline_mode = #tpu.pipeline_mode<synchronous>, transform_indices = @transform_1, window_bounds = array<i64: 128, 768>}, {pipeline_mode = #tpu.pipeline_mode<synchronous>, transform_indices = @transform_2, window_bounds = array<i64: 1, 768>}, {transform_indices = @transform_3, window_bounds = array<i64: 8, 768>}]} {
    %c0 = arith.constant 0 : index
    %c0_0 = arith.constant 0 : index
    %0 = vector.load %arg1[%c0, %c0_0] : memref<8x128xf32, #tpu.memory_space<vmem>>, vector<8x128xf32>
    %c0_1 = arith.constant 0 : index
    %c0_2 = arith.constant 0 : index
    %1 = vector.load %arg2[%c0_1, %c0_2] : memref<128x768xf32, #tpu.memory_space<vmem>>, vector<128x768xf32>
    %cst = arith.constant dense<0.000000e+00> : vector<8x768xf32>
    %2 = tpu.matmul %0, %1, %cst {dimension_numbers = #tpu.dot_dimension_numbers<[1], [0], [0], [1], [0, 0, 1, 1], [], []>} : vector<8x128xf32>, vector<128x768xf32>, vector<8x768xf32> -> vector<8x768xf32>
    %c0_3 = arith.constant 0 : index
    %c0_4 = arith.constant 0 : index
    %3 = vector.load %arg3[%c0_3, %c0_4] : memref<1x768xf32, #tpu.memory_space<vmem>>, vector<1x768xf32>
    %4 = vector.broadcast %3 : vector<1x768xf32> to vector<8x768xf32>
    %5 = arith.addf %2, %4 : vector<8x768xf32>
    %c0_5 = arith.constant 0 : index
    %c0_6 = arith.constant 0 : index
    %6 = vector.load %arg4[%c0_5, %c0_6] : memref<8x768xf32, #tpu.memory_space<vmem>>, vector<8x768xf32>
    tpu.vector_store %arg4[%c0_5, %c0_6], %5 {strides = array<i32>} : memref<8x768xf32, #tpu.memory_space<vmem>>, vector<8x768xf32>,
    return
  }
  func.func @transform_0(%arg0: i32) -> (i32, i32) {
    %c0_i32 = arith.constant 0 : i32
    %c0_i32_0 = arith.constant 0 : i32
    return %arg0, %c0_i32 : i32, i32
  }
  func.func @transform_1(%arg0: i32) -> (i32, i32) {
    %c0_i32 = arith.constant 0 : i32
    %c0_i32_0 = arith.constant 0 : i32
    %c0_i32_1 = arith.constant 0 : i32
    return %c0_i32, %c0_i32_0 : i32, i32
  }
  func.func @transform_2(%arg0: i32) -> (i32, i32) {
    %c0_i32 = arith.constant 0 : i32
    %c0_i32_0 = arith.constant 0 : i32
    %c0_i32_1 = arith.constant 0 : i32
    return %c0_i32, %c0_i32_0 : i32, i32
  }
  func.func @transform_3(%arg0: i32) -> (i32, i32) {
    %c0_i32 = arith.constant 0 : i32
    %c0_i32_0 = arith.constant 0 : i32
    return %arg0, %c0_i32 : i32, i32
  }
}

</mosaic_0001>

<llo_original>
// kernel: tpu_custom_call.1
$region0: #{tpu_custom_call.1}
  #allocation0 [shape = 'u32[]', space=smem, size = 0x4, offset = 0x4, fixed_abs, tag = 'smem constant byte address 0x4 - core index']
  #allocation1 [shape = 'u32[144,128]{1,0:T(1,128)}', space=vmem, size = 0x12000, scoped, tag = 'internal scratch']
  %s0 = inlined_call_operand.hbm [shape: f32[8,128], index: 0, kind: input, shape index: {}]
  %s1 = inlined_call_operand.hbm [shape: f32[128,768], index: 1, kind: input, shape index: {}]
  %s2 = inlined_call_operand.vmem [shape: f32[1,768], index: 2, kind: input, shape index: {}]
  %s3 = inlined_call_operand.hbm [shape: f32[8,768], index: 3, kind: output, shape index: {}]
  %s4 = sld [smem:[#allocation0]]
  $region30: #{tpu_custom_call.1} parent=0
    _
  %s6 = ssub.s32 1, %s4
  %s7 = scalar_select 0, %s6, %s4
  $region1: #{tpu_custom_call.1} parent=0
    #allocation2 [shape = 'u8[4096]{0}', space=vmem, size = 0x1000, scoped, tag = 'input window, operand 0, single buffered']
    #allocation3 [shape = 's32[1]{0}', space=sflag, size = 0x4, scoped, tag = 'scoped memory for tpu_custom_call.1']
    #allocation4 [shape = 's32[1]{0}', space=sflag, size = 0x4, scoped, tag = 'scoped memory for tpu_custom_call.1']
    #allocation5 [shape = 'u8[393216]{0}', space=vmem, size = 0x60000, scoped, tag = 'input window, operand 1, single buffered']
    #allocation6 [shape = 's32[1]{0}', space=sflag, size = 0x4, scoped, tag = 'scoped memory for tpu_custom_call.1']
    #allocation7 [shape = 'u8[24576]{0}', space=vmem, size = 0x6000, scoped, tag = 'output window, operand 0, single buffered']
    %8 = vsyncpa [#allocation3], 0
    %9 = vsyncpa [#allocation6], 0
    %10 = vsyncpa [#allocation4], 0
    // Predicated region
    $region2: #{tpu_custom_call.1} parent=1 // pred_check
      _
    $region3: #{tpu_custom_call.1} parent=1 // pred_check_branch
      %12 = sbr.rel (0) target = $region5
    $region4: #{tpu_custom_call.1} parent=1 // pred_region
      %s14 = ssub.s32 128, 128
      %15 = vsyncadd [#allocation3], %s14
      %s17 = sshll.u32 [#allocation2], 4
      %s18 = int_to_ptr.vmem [resolvable:$true] %s17
      %20 = dma.hbm_to_vmem [thread:$0]  %s0, 128, %s18, [#allocation3]
    $region5: #{tpu_custom_call.1} parent=1 // pred_fallthru
      _
    // Predicated region
    $region6: #{tpu_custom_call.1} parent=1 // pred_check
      _
    $region7: #{tpu_custom_call.1} parent=1 // pred_check_branch
      %22 = sbr.rel (0) target = $region9
    $region8: #{tpu_custom_call.1} parent=1 // pred_region
      %s24 = ssub.s32 12288, 12288
      %25 = vsyncadd [#allocation6], %s24
      %s26 = sshll.u32 [#allocation5], 4
      %s27 = int_to_ptr.vmem [resolvable:$true] %s26
      %32 = dma.hbm_to_vmem [thread:$0]  %s1, 12288, %s27, [#allocation6], 768, 768, 48
    $region9: #{tpu_custom_call.1} parent=1 // pred_fallthru
      _
    // Predicated region
    $region10: #{tpu_custom_call.1} parent=1 // pred_check
      _
    $region11: #{tpu_custom_call.1} parent=1 // pred_check_branch
      %34 = sbr.rel (0) target = $region13
    $region12: #{tpu_custom_call.1} parent=1 // pred_region
      _
    $region13: #{tpu_custom_call.1} parent=1 // pred_fallthru
      _
    // Predicated region
    $region14: #{tpu_custom_call.1} parent=1 // pred_check
      _
    $region15: #{tpu_custom_call.1} parent=1 // pred_check_branch
      %36 = sbr.rel (0) target = $region17
    $region16: #{tpu_custom_call.1} parent=1 // pred_region
      %37 = dma.done [#allocation3], 128
    $region17: #{tpu_custom_call.1} parent=1 // pred_fallthru
      _
    // Predicated region
    $region18: #{tpu_custom_call.1} parent=1 // pred_check
      _
    $region19: #{tpu_custom_call.1} parent=1 // pred_check_branch
      %39 = sbr.rel (0) target = $region21
    $region20: #{tpu_custom_call.1} parent=1 // pred_region
      %40 = dma.done [#allocation6], 12288
    $region21: #{tpu_custom_call.1} parent=1 // pred_fallthru
      _
    %v41 = vld [vmem:[#allocation2] sm:$0xff]
    %v42 = vld [vmem:[#allocation5] sm:$0xff]
    %v43 = vld [vmem:[#allocation5 + $0x8] sm:$0xff]
    %v44 = vld [vmem:[#allocation5 + $0x10] sm:$0xff]
    %v45 = vld [vmem:[#allocation5 + $0x18] sm:$0xff]
    %v46 = vld [vmem:[#allocation5 + $0x20] sm:$0xff]
    %v47 = vld [vmem:[#allocation5 + $0x28] sm:$0xff]
    %v48 = vld [vmem:[#allocation5 + $0x30] sm:$0xff]
    %v49 = vld [vmem:[#allocation5 + $0x38] sm:$0xff]
    %v50 = vld [vmem:[#allocation5 + $0x40] sm:$0xff]
    %v51 = vld [vmem:[#allocation5 + $0x48] sm:$0xff]
    %v52 = vld [vmem:[#allocation5 + $0x50] sm:$0xff]
    %v53 = vld [vmem:[#allocation5 + $0x58] sm:$0xff]
    %v54 = vld [vmem:[#allocation5 + $0x60] sm:$0xff]
    %v55 = vld [vmem:[#allocation5 + $0x68] sm:$0xff]
    %v56 = vld [vmem:[#allocation5 + $0x70] sm:$0xff]
    %v57 = vld [vmem:[#allocation5 + $0x78] sm:$0xff]
    %v58 = vld [vmem:[#allocation5 + $0x80] sm:$0xff]
    %v59 = vld [vmem:[#allocation5 + $0x88] sm:$0xff]
    %v60 = vld [vmem:[#allocation5 + $0x90] sm:$0xff]
    %v61 = vld [vmem:[#allocation5 + $0x98] sm:$0xff]
    %v62 = vld [vmem:[#allocation5 + $0xa0] sm:$0xff]
    %v63 = vld [vmem:[#allocation5 + $0xa8] sm:$0xff]
    %v64 = vld [vmem:[#allocation5 + $0xb0] sm:$0xff]
    %v65 = vld [vmem:[#allocation5 + $0xb8] sm:$0xff]
    %v66 = vld [vmem:[#allocation5 + $0xc0] sm:$0xff]
    %v67 = vld [vmem:[#allocation5 + $0xc8] sm:$0xff]
    %v68 = vld [vmem:[#allocation5 + $0xd0] sm:$0xff]
    %v69 = vld [vmem:[#allocation5 + $0xd8] sm:$0xff]
    %v70 = vld [vmem:[#allocation5 + $0xe0] sm:$0xff]
    %v71 = vld [vmem:[#allocation5 + $0xe8] sm:$0xff]
    %v72 = vld [vmem:[#allocation5 + $0xf0] sm:$0xff]
    %v73 = vld [vmem:[#allocation5 + $0xf8] sm:$0xff]
    %v74 = vld [vmem:[#allocation5 + $0x100] sm:$0xff]
    %v75 = vld [vmem:[#allocation5 + $0x108] sm:$0xff]
    %v76 = vld [vmem:[#allocation5 + $0x110] sm:$0xff]
    %v77 = vld [vmem:[#allocation5 + $0x118] sm:$0xff]
    %v78 = vld [vmem:[#allocation5 + $0x120] sm:$0xff]
    %v79 = vld [vmem:[#allocation5 + $0x128] sm:$0xff]
    %v80 = vld [vmem:[#allocation5 + $0x130] sm:$0xff]
    %v81 = vld [vmem:[#allocation5 + $0x138] sm:$0xff]
    %v82 = vld [vmem:[#allocation5 + $0x140] sm:$0xff]
    %v83 = vld [vmem:[#allocation5 + $0x148] sm:$0xff]
    %v84 = vld [vmem:[#allocation5 + $0x150] sm:$0xff]
    %v85 = vld [vmem:[#allocation5 + $0x158] sm:$0xff]
    %v86 = vld [vmem:[#allocation5 + $0x160] sm:$0xff]
    %v87 = vld [vmem:[#allocation5 + $0x168] sm:$0xff]
    %v88 = vld [vmem:[#allocation5 + $0x170] sm:$0xff]
    %v89 = vld [vmem:[#allocation5 + $0x178] sm:$0xff]
    %v90 = vld [vmem:[#allocation5 + $0x180] sm:$0xff]
    %v91 = vld [vmem:[#allocation5 + $0x188] sm:$0xff]
    %v92 = vld [vmem:[#allocation5 + $0x190] sm:$0xff]
    %v93 = vld [vmem:[#allocation5 + $0x198] sm:$0xff]
    %v94 = vld [vmem:[#allocation5 + $0x1a0] sm:$0xff]
    %v95 = vld [vmem:[#allocation5 + $0x1a8] sm:$0xff]
    %v96 = vld [vmem:[#allocation5 + $0x1b0] sm:$0xff]
    %v97 = vld [vmem:[#allocation5 + $0x1b8] sm:$0xff]
    %v98 = vld [vmem:[#allocation5 + $0x1c0] sm:$0xff]
    %v99 = vld [vmem:[#allocation5 + $0x1c8] sm:$0xff]
    %v100 = vld [vmem:[#allocation5 + $0x1d0] sm:$0xff]
    %v101 = vld [vmem:[#allocation5 + $0x1d8] sm:$0xff]
    %v102 = vld [vmem:[#allocation5 + $0x1e0] sm:$0xff]
    %v103 = vld [vmem:[#allocation5 + $0x1e8] sm:$0xff]
    %v104 = vld [vmem:[#allocation5 + $0x1f0] sm:$0xff]
    %v105 = vld [vmem:[#allocation5 + $0x1f8] sm:$0xff]
    %v106 = vld [vmem:[#allocation5 + $0x200] sm:$0xff]
    %v107 = vld [vmem:[#allocation5 + $0x208] sm:$0xff]
    %v108 = vld [vmem:[#allocation5 + $0x210] sm:$0xff]
    %v109 = vld [vmem:[#allocation5 + $0x218] sm:$0xff]
    %v110 = vld [vmem:[#allocation5 + $0x220] sm:$0xff]
    %v111 = vld [vmem:[#allocation5 + $0x228] sm:$0xff]
    %v112 = vld [vmem:[#allocation5 + $0x230] sm:$0xff]
    %v113 = vld [vmem:[#allocation5 + $0x238] sm:$0xff]
    %v114 = vld [vmem:[#allocation5 + $0x240] sm:$0xff]
    %v115 = vld [vmem:[#allocation5 + $0x248] sm:$0xff]
    %v116 = vld [vmem:[#allocation5 + $0x250] sm:$0xff]
    %v117 = vld [vmem:[#allocation5 + $0x258] sm:$0xff]
    %v118 = vld [vmem:[#allocation5 + $0x260] sm:$0xff]
    %v119 = vld [vmem:[#allocation5 + $0x268] sm:$0xff]
    %v120 = vld [vmem:[#allocation5 + $0x270] sm:$0xff]
    %v121 = vld [vmem:[#allocation5 + $0x278] sm:$0xff]
    %v122 = vld [vmem:[#allocation5 + $0x280] sm:$0xff]
    %v123 = vld [vmem:[#allocation5 + $0x288] sm:$0xff]
    %v124 = vld [vmem:[#allocation5 + $0x290] sm:$0xff]
    %v125 = vld [vmem:[#allocation5 + $0x298] sm:$0xff]
    %v126 = vld [vmem:[#allocation5 + $0x2a0] sm:$0xff]
    %v127 = vld [vmem:[#allocation5 + $0x2a8] sm:$0xff]
    %v128 = vld [vmem:[#allocation5 + $0x2b0] sm:$0xff]
    %v129 = vld [vmem:[#allocation5 + $0x2b8] sm:$0xff]
    %v130 = vld [vmem:[#allocation5 + $0x2c0] sm:$0xff]
    %v131 = vld [vmem:[#allocation5 + $0x2c8] sm:$0xff]
    %v132 = vld [vmem:[#allocation5 + $0x2d0] sm:$0xff]
    %v133 = vld [vmem:[#allocation5 + $0x2d8] sm:$0xff]
    %v134 = vld [vmem:[#allocation5 + $0x2e0] sm:$0xff]
    %v135 = vld [vmem:[#allocation5 + $0x2e8] sm:$0xff]
    %v136 = vld [vmem:[#allocation5 + $0x2f0] sm:$0xff]
    %v137 = vld [vmem:[#allocation5 + $0x2f8] sm:$0xff]
    %v138 = vld [vmem:[%s2] sm:$0x3f]
    %v140 = vlaneseq
    %v141 = vshrl.u32 %v140, 7
    %v142 = vsub.s32 0, %v141
    %v143 = vrot.slane %v138, %v142
    %v144 = vlaneseq
    %v145 = vshrl.u32 %v144, 7
    %v146 = vsub.s32 1, %v145
    %v147 = vrot.slane %v138, %v146
    %v148 = vlaneseq
    %v149 = vshrl.u32 %v148, 7
    %v150 = vsub.s32 2, %v149
    %v151 = vrot.slane %v138, %v150
    %v152 = vlaneseq
    %v153 = vshrl.u32 %v152, 7
    %v154 = vsub.s32 3, %v153
    %v155 = vrot.slane %v138, %v154
    %v156 = vlaneseq
    %v157 = vshrl.u32 %v156, 7
    %v158 = vsub.s32 4, %v157
    %v159 = vrot.slane %v138, %v158
    %v160 = vlaneseq
    %v161 = vshrl.u32 %v160, 7
    %v162 = vsub.s32 5, %v161
    %v163 = vrot.slane %v138, %v162
    %170 = vmatprep.subr.mxu0 %v43
    %171 = vmatpush1.msra.mxu0 %v42
    %172 = vmatprep.subr.mxu0 %v49
    %173 = vmatpush1.msra.mxu0 %v48
    %174 = vmatprep.subr.mxu0 %v55
    %175 = vmatpush1.msra.mxu0 %v54
    %176 = vmatprep.subr.mxu0 %v61
    %177 = vmatpush1.msra.mxu0 %v60
    %178 = vmatprep.subr.mxu0 %v67
    %179 = vmatpush1.msra.mxu0 %v66
    %180 = vmatprep.subr.mxu0 %v73
    %181 = vmatpush1.msra.mxu0 %v72
    %182 = vmatprep.subr.mxu0 %v79
    %183 = vmatpush1.msra.mxu0 %v78
    %184 = vmatprep.subr.mxu0 %v85
    %185 = vmatpush1.msra.mxu0 %v84
    %186 = vmatprep.subr.mxu0 %v91
    %187 = vmatpush1.msra.mxu0 %v90
    %188 = vmatprep.subr.mxu0 %v97
    %189 = vmatpush1.msra.mxu0 %v96
    %190 = vmatprep.subr.mxu0 %v103
    %191 = vmatpush1.msra.mxu0 %v102
    %192 = vmatprep.subr.mxu0 %v109
    %193 = vmatpush1.msra.mxu0 %v108
    %194 = vmatprep.subr.mxu0 %v115
    %195 = vmatpush1.msra.mxu0 %v114
    %196 = vmatprep.subr.mxu0 %v121
    %197 = vmatpush1.msra.mxu0 %v120
    %198 = vmatprep.subr.mxu0 %v127
    %199 = vmatpush1.msra.mxu0 %v126
    %200 = vmatprep.subr.mxu0 %v133
    %201 = vmatpush1.msra.mxu0 %v132
    %202 = vmatprep.subr.mxu0 0.0
    %203 = vmatpush1.msra.mxu0 0.0
    %204 = vmatprep.subr.mxu0 0.0
    %205 = vmatpush1.msra.mxu0 0.0
    %206 = vmatprep.subr.mxu0 0.0
    %207 = vmatpush1.msra.mxu0 0.0
    %208 = vmatprep.subr.mxu0 0.0
    %209 = vmatpush1.msra.mxu0 0.0
    %210 = vmatprep.subr.mxu0 0.0
    %211 = vmatpush1.msra.mxu0 0.0
    %212 = vmatprep.subr.mxu0 0.0
    %213 = vmatpush1.msra.mxu0 0.0
    %214 = vmatprep.subr.mxu0 0.0
    %215 = vmatpush1.msra.mxu0 0.0
    %216 = vmatprep.subr.mxu0 0.0
    %217 = vmatpush1.msra.mxu0 0.0
    %218 = vmatprep.subr.mxu0 0.0
    %219 = vmatpush1.msra.mxu0 0.0
    %220 = vmatprep.subr.mxu0 0.0
    %221 = vmatpush1.msra.mxu0 0.0
    %222 = vmatprep.subr.mxu0 0.0
    %223 = vmatpush1.msra.mxu0 0.0
    %224 = vmatprep.subr.mxu0 0.0
    %225 = vmatpush1.msra.mxu0 0.0
    %226 = vmatprep.subr.mxu0 0.0
    %227 = vmatpush1.msra.mxu0 0.0
    %228 = vmatprep.subr.mxu0 0.0
    %229 = vmatpush1.msra.mxu0 0.0
    %230 = vmatprep.subr.mxu0 0.0
    %231 = vmatpush1.msra.mxu0 0.0
    %232 = vmatprep.subr.mxu0 0.0
    %233 = vmatpush1.msra.mxu0 0.0
    %234 = vmatprep.mubr.f32.mxu0 0.0
    %235 = vmatmul.mubr.f32.gmra.mrb[0].mxu0 %v41
    %v236 = vpop.f32.mrb[0].mxu0
    %v237 = vadd.f32 %v143, %v236
    %v238 = vpop.f32.mrb[0].mxu0
    %v239 = vadd.f32 %v147, %v238
    %240 = vdwg.mxu0
    %241 = vmatprep.subr.mxu0 %v45
    %242 = vmatpush1.msra.mxu0 %v44
    %243 = vmatprep.subr.mxu0 %v51
    %244 = vmatpush1.msra.mxu0 %v50
    %245 = vmatprep.subr.mxu0 %v57
    %246 = vmatpush1.msra.mxu0 %v56
    %247 = vmatprep.subr.mxu0 %v63
    %248 = vmatpush1.msra.mxu0 %v62
    %249 = vmatprep.subr.mxu0 %v69
    %250 = vmatpush1.msra.mxu0 %v68
    %251 = vmatprep.subr.mxu0 %v75
    %252 = vmatpush1.msra.mxu0 %v74
    %253 = vmatprep.subr.mxu0 %v81
    %254 = vmatpush1.msra.mxu0 %v80
    %255 = vmatprep.subr.mxu0 %v87
    %256 = vmatpush1.msra.mxu0 %v86
    %257 = vmatprep.subr.mxu0 %v93
    %258 = vmatpush1.msra.mxu0 %v92
    %259 = vmatprep.subr.mxu0 %v99
    %260 = vmatpush1.msra.mxu0 %v98
    %261 = vmatprep.subr.mxu0 %v105
    %262 = vmatpush1.msra.mxu0 %v104
    %263 = vmatprep.subr.mxu0 %v111
    %264 = vmatpush1.msra.mxu0 %v110
    %265 = vmatprep.subr.mxu0 %v117
    %266 = vmatpush1.msra.mxu0 %v116
    %267 = vmatprep.subr.mxu0 %v123
    %268 = vmatpush1.msra.mxu0 %v122
    %269 = vmatprep.subr.mxu0 %v129
    %270 = vmatpush1.msra.mxu0 %v128
    %271 = vmatprep.subr.mxu0 %v135
    %272 = vmatpush1.msra.mxu0 %v134
    %273 = vmatprep.subr.mxu0 0.0
    %274 = vmatpush1.msra.mxu0 0.0
    %275 = vmatprep.subr.mxu0 0.0
    %276 = vmatpush1.msra.mxu0 0.0
    %277 = vmatprep.subr.mxu0 0.0
    %278 = vmatpush1.msra.mxu0 0.0
    %279 = vmatprep.subr.mxu0 0.0
    %280 = vmatpush1.msra.mxu0 0.0
    %281 = vmatprep.subr.mxu0 0.0
    %282 = vmatpush1.msra.mxu0 0.0
    %283 = vmatprep.subr.mxu0 0.0
    %284 = vmatpush1.msra.mxu0 0.0
    %285 = vmatprep.subr.mxu0 0.0
    %286 = vmatpush1.msra.mxu0 0.0
    %287 = vmatprep.subr.mxu0 0.0
    %288 = vmatpush1.msra.mxu0 0.0
    %289 = vmatprep.subr.mxu0 0.0
    %290 = vmatpush1.msra.mxu0 0.0
    %291 = vmatprep.subr.mxu0 0.0
    %292 = vmatpush1.msra.mxu0 0.0
    %293 = vmatprep.subr.mxu0 0.0
    %294 = vmatpush1.msra.mxu0 0.0
    %295 = vmatprep.subr.mxu0 0.0
    %296 = vmatpush1.msra.mxu0 0.0
    %297 = vmatprep.subr.mxu0 0.0
    %298 = vmatpush1.msra.mxu0 0.0
    %299 = vmatprep.subr.mxu0 0.0
    %300 = vmatpush1.msra.mxu0 0.0
    %301 = vmatprep.subr.mxu0 0.0
    %302 = vmatpush1.msra.mxu0 0.0
    %303 = vmatprep.subr.mxu0 0.0
    %304 = vmatpush1.msra.mxu0 0.0
    %305 = vmatprep.mubr.f32.mxu0 0.0
    %306 = vmatmul.mubr.f32.gmra.mrb[0].mxu0 %v41
    %v307 = vpop.f32.mrb[0].mxu0
    %v308 = vadd.f32 %v151, %v307
    %v309 = vpop.f32.mrb[0].mxu0
    %v310 = vadd.f32 %v155, %v309
    %311 = vdwg.mxu0
    %312 = vmatprep.subr.mxu0 %v47
    %313 = vmatpush1.msra.mxu0 %v46
    %314 = vmatprep.subr.mxu0 %v53
    %315 = vmatpush1.msra.mxu0 %v52
    %316 = vmatprep.subr.mxu0 %v59
    %317 = vmatpush1.msra.mxu0 %v58
    %318 = vmatprep.subr.mxu0 %v65
    %319 = vmatpush1.msra.mxu0 %v64
    %320 = vmatprep.subr.mxu0 %v71
    %321 = vmatpush1.msra.mxu0 %v70
    %322 = vmatprep.subr.mxu0 %v77
    %323 = vmatpush1.msra.mxu0 %v76
    %324 = vmatprep.subr.mxu0 %v83
    %325 = vmatpush1.msra.mxu0 %v82
    %326 = vmatprep.subr.mxu0 %v89
    %327 = vmatpush1.msra.mxu0 %v88
    %328 = vmatprep.subr.mxu0 %v95
    %329 = vmatpush1.msra.mxu0 %v94
    %330 = vmatprep.subr.mxu0 %v101
    %331 = vmatpush1.msra.mxu0 %v100
    %332 = vmatprep.subr.mxu0 %v107
    %333 = vmatpush1.msra.mxu0 %v106
    %334 = vmatprep.subr.mxu0 %v113
    %335 = vmatpush1.msra.mxu0 %v112
    %336 = vmatprep.subr.mxu0 %v119
    %337 = vmatpush1.msra.mxu0 %v118
    %338 = vmatprep.subr.mxu0 %v125
    %339 = vmatpush1.msra.mxu0 %v124
    %340 = vmatprep.subr.mxu0 %v131
    %341 = vmatpush1.msra.mxu0 %v130
    %342 = vmatprep.subr.mxu0 %v137
    %343 = vmatpush1.msra.mxu0 %v136
    %344 = vmatprep.subr.mxu0 0.0
    %345 = vmatpush1.msra.mxu0 0.0
    %346 = vmatprep.subr.mxu0 0.0
    %347 = vmatpush1.msra.mxu0 0.0
    %348 = vmatprep.subr.mxu0 0.0
    %349 = vmatpush1.msra.mxu0 0.0
    %350 = vmatprep.subr.mxu0 0.0
    %351 = vmatpush1.msra.mxu0 0.0
    %352 = vmatprep.subr.mxu0 0.0
    %353 = vmatpush1.msra.mxu0 0.0
    %354 = vmatprep.subr.mxu0 0.0
    %355 = vmatpush1.msra.mxu0 0.0
    %356 = vmatprep.subr.mxu0 0.0
    %357 = vmatpush1.msra.mxu0 0.0
    %358 = vmatprep.subr.mxu0 0.0
    %359 = vmatpush1.msra.mxu0 0.0
    %360 = vmatprep.subr.mxu0 0.0
    %361 = vmatpush1.msra.mxu0 0.0
    %362 = vmatprep.subr.mxu0 0.0
    %363 = vmatpush1.msra.mxu0 0.0
    %364 = vmatprep.subr.mxu0 0.0
    %365 = vmatpush1.msra.mxu0 0.0
    %366 = vmatprep.subr.mxu0 0.0
    %367 = vmatpush1.msra.mxu0 0.0
    %368 = vmatprep.subr.mxu0 0.0
    %369 = vmatpush1.msra.mxu0 0.0
    %370 = vmatprep.subr.mxu0 0.0
    %371 = vmatpush1.msra.mxu0 0.0
    %372 = vmatprep.subr.mxu0 0.0
    %373 = vmatpush1.msra.mxu0 0.0
    %374 = vmatprep.subr.mxu0 0.0
    %375 = vmatpush1.msra.mxu0 0.0
    %376 = vmatprep.mubr.f32.mxu0 0.0
    %377 = vmatmul.mubr.f32.gmra.mrb[0].mxu0 %v41
    %v378 = vpop.f32.mrb[0].mxu0
    %v379 = vadd.f32 %v159, %v378
    %v380 = vpop.f32.mrb[0].mxu0
    %v381 = vadd.f32 %v163, %v380
    %382 = vdwg.mxu0
    %383 = vst [vmem:[#allocation7] sm:$0xff] %v237
    %384 = vst [vmem:[#allocation7 + $0x8] sm:$0xff] %v239
    %385 = vst [vmem:[#allocation7 + $0x10] sm:$0xff] %v308
    %386 = vst [vmem:[#allocation7 + $0x18] sm:$0xff] %v310
    %387 = vst [vmem:[#allocation7 + $0x20] sm:$0xff] %v379
    %388 = vst [vmem:[#allocation7 + $0x28] sm:$0xff] %v381
    // Predicated region
    $region22: #{tpu_custom_call.1} parent=1 // pred_check
      _
    $region23: #{tpu_custom_call.1} parent=1 // pred_check_branch
      %390 = sbr.rel (0) target = $region25
    $region24: #{tpu_custom_call.1} parent=1 // pred_region
      %s392 = ssub.s32 768, 768
      %393 = vsyncadd [#allocation4], %s392
      %s395 = sshll.u32 [#allocation7], 4
      %s396 = int_to_ptr.vmem [resolvable:$true] %s395
      %398 = dma.vmem_to_hbm [thread:$0]  %s396, 768, %s3, [#allocation4]
    $region25: #{tpu_custom_call.1} parent=1 // pred_fallthru
      _
    // Predicated region
    $region26: #{tpu_custom_call.1} parent=1 // pred_check
      _
    $region27: #{tpu_custom_call.1} parent=1 // pred_check_branch
      %400 = sbr.rel (0) target = $region29
    $region28: #{tpu_custom_call.1} parent=1 // pred_region
      %401 = dma.done [#allocation4], 768
    $region29: #{tpu_custom_call.1} parent=1 // pred_fallthru
      _
    %402 = vsyncpa [#allocation3], 1
    %403 = vsyncpa [#allocation6], 1
    %404 = vsyncpa [#allocation4], 1

</llo_original>
